<compile_context>
chip_gen: v6e
topology: v6e:2x2x1
jax: 0.10.0
libtpu: 0.0.40
codegen_flags: <defaults>
</compile_context>

<pallas_src>
import functools
import math

import jax
import jax.numpy as jnp
from jax.experimental import pallas as pl
from jax.experimental.pallas import tpu as pltpu


def _round_up(x, m):
    return (x + m - 1) // m * m


def _norm_kernel(t_ref, scale_ref, bd_ref, bdt_ref, o_ref, *, inv_sqrt_dim, eps):
    # t_ref:     (rt, W)  packed activations (G logical rows per packed row)
    # scale_ref: (1, W)   per-lane scale (degree's (D,1) param tiled over m and G)
    # bd_ref:    (W, G)   block-diagonal ones (lane -> segment indicator)
    # bdt_ref:   (G, W)   its transpose (segment -> lane broadcast)
    t = t_ref[...].astype(jnp.float32)
    # Segmented sum-of-squares over each feat-wide lane group on the idle MXU.
    sumsq = jnp.dot(t * t, bd_ref[...],
                    preferred_element_type=jnp.float32)            # (rt, G)
    rms = jnp.sqrt(sumsq) * inv_sqrt_dim                            # ||t||_F / sqrt(dim)
    inv = pl.reciprocal(jnp.maximum(rms, eps), approx=False)        # (rt, G)
    # Broadcast each segment's 1/rms back across its feat lanes (second tiny matmul).
    inv_full = jnp.dot(inv, bdt_ref[...],
                       preferred_element_type=jnp.float32)          # (rt, W)
    o_ref[...] = (t * inv_full * scale_ref[...]).astype(o_ref.dtype)


def _norm_one_degree(t, scale, *, eps, row_tile=512):
    """t: (B, N, D, M), scale: (D, 1)."""
    B, N, D, M = t.shape
    rows, feat = B * N, D * M

    # Pack G logical rows per 128-lane-aligned packed row (lane-dense slab).
    G = 128 // math.gcd(feat, 128)
    W = G * feat                                      # multiple of 128

    pr = -(-rows // G)                                # packed rows needed (ceil)
    rt = min(row_tile, _round_up(pr, 8))              # sublane tile, multiple of 8
    pr_pad = _round_up(pr, rt)                        # pad instead of whole-slab fallback
    rows_pad = pr_pad * G

    t2 = t.reshape(rows, feat)
    if rows_pad != rows:
        t2 = jnp.pad(t2, ((0, rows_pad - rows), (0, 0)))
    t2 = t2.reshape(pr_pad, W)                        # free row-major repack

    # (D, 1) scale broadcast over m, then tiled across the G packed segments.
    scale_feat = jnp.broadcast_to(scale.astype(jnp.float32), (D, M)).reshape(feat)
    scale_row = jnp.tile(scale_feat, G).reshape(1, W)

    # Block-diagonal ones: bd[j, g] = 1 iff lane j belongs to segment g.
    seg = jnp.arange(W) // feat
    bd = (seg[:, None] == jnp.arange(G)[None, :]).astype(jnp.float32)   # (W, G)
    bdt = bd.T                                                          # (G, W)

    grid = (pr_pad // rt,)
    out = pl.pallas_call(
        functools.partial(_norm_kernel, inv_sqrt_dim=float(D) ** -0.5, eps=eps),
        out_shape=jax.ShapeDtypeStruct((pr_pad, W), t.dtype),
        grid_spec=pltpu.PrefetchScalarGridSpec(
            num_scalar_prefetch=0,
            grid=grid,
            in_specs=[
                pl.BlockSpec((rt, W), lambda i: (i, 0)),   # activations, row-tiled
                pl.BlockSpec((1, W), lambda i: (0, 0)),    # scale, resident
                pl.BlockSpec((W, G), lambda i: (0, 0)),    # block-diag ones, resident
                pl.BlockSpec((G, W), lambda i: (0, 0)),    # transpose, resident
            ],
            out_specs=pl.BlockSpec((rt, W), lambda i: (i, 0)),
        ),
        compiler_params=pltpu.CompilerParams(
            dimension_semantics=("parallel",)),
    )(t2, scale_row, bd, bdt)

    out = out.reshape(rows_pad, feat)[:rows]
    return out.reshape(B, N, D, M)


class Norm:
    """JAX/Pallas port of equiformer_pytorch Norm (RMSNorm per degree)."""

    def __init__(self, fiber, eps=1e-12):
        self.fiber = tuple(fiber)
        self.eps = eps
        # matches nn.Parameter(torch.ones(dim, 1)) for each degree
        self.transforms = [jnp.ones((dim, 1), jnp.float32) for dim in self.fiber]

    def __call__(self, features):
        # TODO(synk): fuse all degrees into one pallas_call (concatenate packed slabs
        # along rows, select per-degree scale via scalar prefetch) to amortize launch
        # and pipeline-warmup cost when many degrees are present.
        output = {}
        for scale, (degree, t) in zip(self.transforms, features.items()):
            output[degree] = _norm_one_degree(t, scale, eps=self.eps)
        return output


def _reference(features, transforms, eps):
    # pure-JAX transcription of the PyTorch forward
    out = {}
    for scale, (degree, t) in zip(transforms, features.items()):
        dim = t.shape[-2]
        l2 = jnp.linalg.norm(t, axis=-1, keepdims=True)
        rms = jnp.linalg.norm(l2, axis=-2, keepdims=True) * dim ** (-0.5)
        out[degree] = t / jnp.maximum(rms, eps) * scale
    return out


if __name__ == "__main__":
    key = jax.random.PRNGKey(0)
    fiber = (32, 16)          # dims for degree 0 and degree 1
    B, N = 2, 8               # batch, sequence length

    features = {}
    for degree, dim in enumerate(fiber):
        m = 2 * degree + 1
        key, sub = jax.random.split(key)
        features[degree] = jax.random.normal(sub, (B, N, dim, m), jnp.float32)

    norm = Norm(fiber)
    # use non-trivial per-channel scales so the scale path is actually exercised
    new_transforms = []
    for dim in fiber:
        key, sub = jax.random.split(key)
        new_transforms.append(jax.random.normal(sub, (dim, 1), jnp.float32))
    norm.transforms = new_transforms

    out = norm(features)
    jax.block_until_ready(out)

    ref = _reference(features, norm.transforms, norm.eps)
    for degree in features:
        assert out[degree].shape == features[degree].shape
        assert jnp.allclose(out[degree], ref[degree], atol=1e-5, rtol=1e-5), (
            f"mismatch at degree {degree}")

    print("KERNEL_OK")
</pallas_src>

<mosaic_0001>
module attributes {stable_mosaic.version = 11 : i64} {
  func.func @_norm_kernel(%arg0: i32, %arg1: memref<8x128xf32, #tpu.memory_space<vmem>>, %arg2: memref<1x128xf32, #tpu.memory_space<vmem>>, %arg3: memref<128x4xf32, #tpu.memory_space<vmem>>, %arg4: memref<4x128xf32, #tpu.memory_space<vmem>>, %arg5: memref<8x128xf32, #tpu.memory_space<vmem>>) attributes {dimension_semantics = [#tpu.dimension_semantics<parallel>], iteration_bounds = array<i64: 1>, scalar_prefetch = 0 : i64, scratch_operands = 0 : i64, tpu.core_type = #tpu.core_type<tc>, window_params = [{transform_indices = @transform_0, window_bounds = array<i64: 8, 128>}, {pipeline_mode = #tpu.pipeline_mode<synchronous>, transform_indices = @transform_1, window_bounds = array<i64: 1, 128>}, {pipeline_mode = #tpu.pipeline_mode<synchronous>, transform_indices = @transform_2, window_bounds = array<i64: 128, 4>}, {pipeline_mode = #tpu.pipeline_mode<synchronous>, transform_indices = @transform_3, window_bounds = array<i64: 4, 128>}, {transform_indices = @transform_4, window_bounds = array<i64: 8, 128>}]} {
    %c0 = arith.constant 0 : index
    %c0_0 = arith.constant 0 : index
    %0 = vector.load %arg1[%c0, %c0_0] : memref<8x128xf32, #tpu.memory_space<vmem>>, vector<8x128xf32>
    %1 = arith.mulf %0, %0 : vector<8x128xf32>
    %c0_1 = arith.constant 0 : index
    %c0_2 = arith.constant 0 : index
    %2 = vector.load %arg3[%c0_1, %c0_2] : memref<128x4xf32, #tpu.memory_space<vmem>>, vector<128x4xf32>
    %cst = arith.constant dense<0.000000e+00> : vector<8x4xf32>
    %3 = tpu.matmul %1, %2, %cst {dimension_numbers = #tpu.dot_dimension_numbers<[1], [0], [0], [1], [0, 0, 1, 1], [], []>} : vector<8x128xf32>, vector<128x4xf32>, vector<8x4xf32> -> vector<8x4xf32>
    %4 = math.sqrt %3 : vector<8x4xf32>
    %cst_3 = arith.constant 0.176776692 : f32
    %5 = vector.broadcast %cst_3 : f32 to vector<8x4xf32>
    %6 = arith.mulf %4, %5 : vector<8x4xf32>
    %cst_4 = arith.constant 9.99999996E-13 : f32
    %7 = vector.broadcast %cst_4 : f32 to vector<8x4xf32>
    %8 = arith.maximumf %6, %7 : vector<8x4xf32>
    %9 = tpu.reciprocal %8 : vector<8x4xf32> -> vector<8x4xf32>
    %c0_5 = arith.constant 0 : index
    %c0_6 = arith.constant 0 : index
    %10 = vector.load %arg4[%c0_5, %c0_6] : memref<4x128xf32, #tpu.memory_space<vmem>>, vector<4x128xf32>
    %cst_7 = arith.constant dense<0.000000e+00> : vector<8x128xf32>
    %11 = tpu.matmul %9, %10, %cst_7 {dimension_numbers = #tpu.dot_dimension_numbers<[1], [0], [0], [1], [0, 0, 1, 1], [], []>} : vector<8x4xf32>, vector<4x128xf32>, vector<8x128xf32> -> vector<8x128xf32>
    %12 = arith.mulf %0, %11 : vector<8x128xf32>
    %c0_8 = arith.constant 0 : index
    %c0_9 = arith.constant 0 : index
    %13 = vector.load %arg2[%c0_8, %c0_9] : memref<1x128xf32, #tpu.memory_space<vmem>>, vector<1x128xf32>
    %14 = vector.broadcast %13 : vector<1x128xf32> to vector<8x128xf32>
    %15 = arith.mulf %12, %14 : vector<8x128xf32>
    %c0_10 = arith.constant 0 : index
    %c0_11 = arith.constant 0 : index
    %16 = vector.load %arg5[%c0_10, %c0_11] : memref<8x128xf32, #tpu.memory_space<vmem>>, vector<8x128xf32>
    tpu.vector_store %arg5[%c0_10, %c0_11], %15 {strides = array<i32>} : memref<8x128xf32, #tpu.memory_space<vmem>>, vector<8x128xf32>,
    return
  }
  func.func @transform_0(%arg0: i32) -> (i32, i32) {
    %c0_i32 = arith.constant 0 : i32
    %c0_i32_0 = arith.constant 0 : i32
    return %arg0, %c0_i32 : i32, i32
  }
  func.func @transform_1(%arg0: i32) -> (i32, i32) {
    %c0_i32 = arith.constant 0 : i32
    %c0_i32_0 = arith.constant 0 : i32
    %c0_i32_1 = arith.constant 0 : i32
    return %c0_i32, %c0_i32_0 : i32, i32
  }
  func.func @transform_2(%arg0: i32) -> (i32, i32) {
    %c0_i32 = arith.constant 0 : i32
    %c0_i32_0 = arith.constant 0 : i32
    %c0_i32_1 = arith.constant 0 : i32
    return %c0_i32, %c0_i32_0 : i32, i32
  }
  func.func @transform_3(%arg0: i32) -> (i32, i32) {
    %c0_i32 = arith.constant 0 : i32
    %c0_i32_0 = arith.constant 0 : i32
    %c0_i32_1 = arith.constant 0 : i32
    return %c0_i32, %c0_i32_0 : i32, i32
  }
  func.func @transform_4(%arg0: i32) -> (i32, i32) {
    %c0_i32 = arith.constant 0 : i32
    %c0_i32_0 = arith.constant 0 : i32
    return %arg0, %c0_i32 : i32, i32
  }
}

</mosaic_0001>

<llo_original>
// kernel: tpu_custom_call.1
$region0: #{tpu_custom_call.1}
  #allocation0 [shape = 'u32[]', space=smem, size = 0x4, offset = 0x4, fixed_abs, tag = 'smem constant byte address 0x4 - core index']
  #allocation1 [shape = 'u32[144,128]{1,0:T(1,128)}', space=vmem, size = 0x12000, scoped, tag = 'internal scratch']
  %s0 = inlined_call_operand.vmem [shape: f32[8,128], index: 0, kind: input, shape index: {}]
  %s1 = inlined_call_operand.vmem [shape: f32[1,128], index: 1, kind: input, shape index: {}]
  %s2 = inlined_call_operand.vmem [shape: f32[128,4], index: 2, kind: input, shape index: {}]
  %s3 = inlined_call_operand.vmem [shape: f32[4,128], index: 3, kind: input, shape index: {}]
  %s4 = inlined_call_operand.hbm [shape: f32[8,128], index: 4, kind: output, shape index: {}]
  %s5 = sld [smem:[#allocation0]]
  $region26: #{tpu_custom_call.1} parent=0
    _
  %s7 = ssub.s32 1, %s5
  %s8 = scalar_select 0, %s7, %s5
  $region1: #{tpu_custom_call.1} parent=0
    #allocation2 [shape = 'u8[4096]{0}', space=vmem, size = 0x1000, scoped, tag = 'output window, operand 0, single buffered']
    #allocation3 [shape = 's32[1]{0}', space=sflag, size = 0x4, scoped, tag = 'scoped memory for tpu_custom_call.1']
    %9 = vsyncpa [#allocation3], 0
    // Predicated region
    $region2: #{tpu_custom_call.1} parent=1 // pred_check
      _
    $region3: #{tpu_custom_call.1} parent=1 // pred_check_branch
      %11 = sbr.rel (0) target = $region5
    $region4: #{tpu_custom_call.1} parent=1 // pred_region
      _
    $region5: #{tpu_custom_call.1} parent=1 // pred_fallthru
      _
    // Predicated region
    $region6: #{tpu_custom_call.1} parent=1 // pred_check
      _
    $region7: #{tpu_custom_call.1} parent=1 // pred_check_branch
      %13 = sbr.rel (0) target = $region9
    $region8: #{tpu_custom_call.1} parent=1 // pred_region
      _
    $region9: #{tpu_custom_call.1} parent=1 // pred_fallthru
      _
    // Predicated region
    $region10: #{tpu_custom_call.1} parent=1 // pred_check
      _
    $region11: #{tpu_custom_call.1} parent=1 // pred_check_branch
      %15 = sbr.rel (0) target = $region13
    $region12: #{tpu_custom_call.1} parent=1 // pred_region
      _
    $region13: #{tpu_custom_call.1} parent=1 // pred_fallthru
      _
    // Predicated region
    $region14: #{tpu_custom_call.1} parent=1 // pred_check
      _
    $region15: #{tpu_custom_call.1} parent=1 // pred_check_branch
      %17 = sbr.rel (0) target = $region17
    $region16: #{tpu_custom_call.1} parent=1 // pred_region
      _
    $region17: #{tpu_custom_call.1} parent=1 // pred_fallthru
      _
    %v18 = vld [vmem:[%s0] sm:$0xff]
    %v19 = vmul.f32 %v18, %v18
    %v20 = vld [vmem:[%s2] sm:$0xff]
    %v21 = vld [vmem:[%s2 + $0x8] sm:$0xff]
    %v22 = vld [vmem:[%s2 + $0x10] sm:$0xff]
    %v23 = vld [vmem:[%s2 + $0x18] sm:$0xff]
    %v24 = vld [vmem:[%s2 + $0x20] sm:$0xff]
    %v25 = vld [vmem:[%s2 + $0x28] sm:$0xff]
    %v26 = vld [vmem:[%s2 + $0x30] sm:$0xff]
    %v27 = vld [vmem:[%s2 + $0x38] sm:$0xff]
    %v28 = vld [vmem:[%s2 + $0x40] sm:$0xff]
    %v29 = vld [vmem:[%s2 + $0x48] sm:$0xff]
    %v30 = vld [vmem:[%s2 + $0x50] sm:$0xff]
    %v31 = vld [vmem:[%s2 + $0x58] sm:$0xff]
    %v32 = vld [vmem:[%s2 + $0x60] sm:$0xff]
    %v33 = vld [vmem:[%s2 + $0x68] sm:$0xff]
    %v34 = vld [vmem:[%s2 + $0x70] sm:$0xff]
    %v35 = vld [vmem:[%s2 + $0x78] sm:$0xff]
    %36 = vmatprep.subr.mxu0 0.0
    %37 = vmatpush1.msra.mxu0 %v35
    %38 = vmatprep.subr.mxu0 0.0
    %39 = vmatpush1.msra.mxu0 %v34
    %40 = vmatprep.subr.mxu0 0.0
    %41 = vmatpush1.msra.mxu0 %v33
    %42 = vmatprep.subr.mxu0 0.0
    %43 = vmatpush1.msra.mxu0 %v32
    %44 = vmatprep.subr.mxu0 0.0
    %45 = vmatpush1.msra.mxu0 %v31
    %46 = vmatprep.subr.mxu0 0.0
    %47 = vmatpush1.msra.mxu0 %v30
    %48 = vmatprep.subr.mxu0 0.0
    %49 = vmatpush1.msra.mxu0 %v29
    %50 = vmatprep.subr.mxu0 0.0
    %51 = vmatpush1.msra.mxu0 %v28
    %52 = vmatprep.subr.mxu0 0.0
    %53 = vmatpush1.msra.mxu0 %v27
    %54 = vmatprep.subr.mxu0 0.0
    %55 = vmatpush1.msra.mxu0 %v26
    %56 = vmatprep.subr.mxu0 0.0
    %57 = vmatpush1.msra.mxu0 %v25
    %58 = vmatprep.subr.mxu0 0.0
    %59 = vmatpush1.msra.mxu0 %v24
    %60 = vmatprep.subr.mxu0 0.0
    %61 = vmatpush1.msra.mxu0 %v23
    %62 = vmatprep.subr.mxu0 0.0
    %63 = vmatpush1.msra.mxu0 %v22
    %64 = vmatprep.subr.mxu0 0.0
    %65 = vmatpush1.msra.mxu0 %v21
    %66 = vmatprep.subr.mxu0 0.0
    %67 = vmatpush1.msra.mxu0 %v20
    %68 = vmatprep.subr.mxu0 0.0
    %69 = vmatpush2.msra.mxu0 0.0
    %70 = vmatprep.subr.mxu0 0.0
    %71 = vmatpush2.msra.mxu0 0.0
    %72 = vmatprep.subr.mxu0 0.0
    %73 = vmatpush2.msra.mxu0 0.0
    %74 = vmatprep.subr.mxu0 0.0
    %75 = vmatpush2.msra.mxu0 0.0
    %76 = vmatprep.subr.mxu0 0.0
    %77 = vmatpush2.msra.mxu0 0.0
    %78 = vmatprep.subr.mxu0 0.0
    %79 = vmatpush2.msra.mxu0 0.0
    %80 = vmatprep.subr.mxu0 0.0
    %81 = vmatpush2.msra.mxu0 0.0
    %82 = vmatprep.subr.mxu0 0.0
    %83 = vmatpush2.msra.mxu0 0.0
    %84 = vmatprep.subr.mxu0 0.0
    %85 = vmatpush2.msra.mxu0 0.0
    %86 = vmatprep.subr.mxu0 0.0
    %87 = vmatpush2.msra.mxu0 0.0
    %88 = vmatprep.subr.mxu0 0.0
    %89 = vmatpush2.msra.mxu0 0.0
    %90 = vmatprep.subr.mxu0 0.0
    %91 = vmatpush2.msra.mxu0 0.0
    %92 = vmatprep.subr.mxu0 0.0
    %93 = vmatpush2.msra.mxu0 0.0
    %94 = vmatprep.subr.mxu0 0.0
    %95 = vmatpush2.msra.mxu0 0.0
    %96 = vmatprep.subr.mxu0 0.0
    %97 = vmatpush2.msra.mxu0 0.0
    %98 = vmatprep.subr.mxu0 0.0
    %99 = vmatpush2.msra.mxu0 0.0
    %100 = vmatprep.mubr.f32.mxu0 0.0
    %101 = vmatmul.mubr.f32.gmra.mxu0 %v19
    %v102 = vpop.f32.mrf.mxu0
    %v103 = vadd.f32 0.0, %v102
    %v104 = vpop.f32.mrf.mxu0
    %105 = vdwg.mxu0
    %v106 = vrsqrt.pop %v103
    %v107 = vmul.f32 %v103, %v106
    %vm108 = vcmp.eq.f32.partialorder %v103, inf
    %v109 = vsel %vm108, %v103, %v107
    %vm110 = vcmp.eq.f32.partialorder %v103, 0.0
    %v111 = vand.u32 %v103, 2147483648
    %v112 = vsel %vm110, %v111, %v109
    %v113 = vmul.f32 %v112, 0.17677669
    %v114 = vmax.f32 %v113, 1e-12
    %v115 = vrcp.pop %v114
    %v116 = vld [vmem:[%s3] sm:$0xf]
    %vm117 = vcmask 31744
    %v119 = vsel %vm117, %v115, 0
    %vm121 = vcmask 1043456
    %v123 = vsel %vm121, %v116, 0
    %125 = vmatprep.subr.mxu0 0.0
    %126 = vmatpush1.msra.mxu0 0.0
    %127 = vmatprep.subr.mxu0 0.0
    %128 = vmatpush1.msra.mxu0 0.0
    %129 = vmatprep.subr.mxu0 0.0
    %130 = vmatpush1.msra.mxu0 0.0
    %131 = vmatprep.subr.mxu0 0.0
    %132 = vmatpush1.msra.mxu0 0.0
    %133 = vmatprep.subr.mxu0 0.0
    %134 = vmatpush1.msra.mxu0 0.0
    %135 = vmatprep.subr.mxu0 0.0
    %136 = vmatpush1.msra.mxu0 0.0
    %137 = vmatprep.subr.mxu0 0.0
    %138 = vmatpush1.msra.mxu0 0.0
    %139 = vmatprep.subr.mxu0 0.0
    %140 = vmatpush1.msra.mxu0 0.0
    %141 = vmatprep.subr.mxu0 0.0
    %142 = vmatpush1.msra.mxu0 0.0
    %143 = vmatprep.subr.mxu0 0.0
    %144 = vmatpush1.msra.mxu0 0.0
    %145 = vmatprep.subr.mxu0 0.0
    %146 = vmatpush1.msra.mxu0 0.0
    %147 = vmatprep.subr.mxu0 0.0
    %148 = vmatpush1.msra.mxu0 0.0
    %149 = vmatprep.subr.mxu0 0.0
    %150 = vmatpush1.msra.mxu0 0.0
    %151 = vmatprep.subr.mxu0 0.0
    %152 = vmatpush1.msra.mxu0 0.0
    %153 = vmatprep.subr.mxu0 0.0
    %154 = vmatpush1.msra.mxu0 0.0
    %155 = vmatprep.subr.mxu0 0.0
    %156 = vmatpush1.msra.mxu0 %v123
    %157 = vmatprep.subr.mxu0 0.0
    %158 = vmatpush2.msra.mxu0 0.0
    %159 = vmatprep.subr.mxu0 0.0
    %160 = vmatpush2.msra.mxu0 0.0
    %161 = vmatprep.subr.mxu0 0.0
    %162 = vmatpush2.msra.mxu0 0.0
    %163 = vmatprep.subr.mxu0 0.0
    %164 = vmatpush2.msra.mxu0 0.0
    %165 = vmatprep.subr.mxu0 0.0
    %166 = vmatpush2.msra.mxu0 0.0
    %167 = vmatprep.subr.mxu0 0.0
    %168 = vmatpush2.msra.mxu0 0.0
    %169 = vmatprep.subr.mxu0 0.0
    %170 = vmatpush2.msra.mxu0 0.0
    %171 = vmatprep.subr.mxu0 0.0
    %172 = vmatpush2.msra.mxu0 0.0
    %173 = vmatprep.subr.mxu0 0.0
    %174 = vmatpush2.msra.mxu0 0.0
    %175 = vmatprep.subr.mxu0 0.0
    %176 = vmatpush2.msra.mxu0 0.0
    %177 = vmatprep.subr.mxu0 0.0
    %178 = vmatpush2.msra.mxu0 0.0
    %179 = vmatprep.subr.mxu0 0.0
    %180 = vmatpush2.msra.mxu0 0.0
    %181 = vmatprep.subr.mxu0 0.0
    %182 = vmatpush2.msra.mxu0 0.0
    %183 = vmatprep.subr.mxu0 0.0
    %184 = vmatpush2.msra.mxu0 0.0
    %185 = vmatprep.subr.mxu0 0.0
    %186 = vmatpush2.msra.mxu0 0.0
    %187 = vmatprep.subr.mxu0 0.0
    %188 = vmatpush2.msra.mxu0 0.0
    %189 = vmatprep.mubr.f32.mxu0 0.0
    %190 = vmatmul.mubr.f32.gmra.mxu0 %v119
    %v191 = vpop.f32.mrf.mxu0
    %v192 = vadd.f32 0.0, %v191
    %v193 = vpop.f32.mrf.mxu0
    %194 = vdwg.mxu0
    %v195 = vmul.f32 %v18, %v192
    %v196 = vld [vmem:[%s1] sm:$0x1]
    %v198 = vlaneseq
    %v199 = vshrl.u32 %v198, 7
    %v200 = vsub.s32 0, %v199
    %v201 = vrot.slane %v196, %v200
    %v203 = vmul.f32 %v195, %v201
    %204 = vst [vmem:[#allocation2] sm:$0xff] %v203
    // Predicated region
    $region18: #{tpu_custom_call.1} parent=1 // pred_check
      _
    $region19: #{tpu_custom_call.1} parent=1 // pred_check_branch
      %206 = sbr.rel (0) target = $region21
    $region20: #{tpu_custom_call.1} parent=1 // pred_region
      %s208 = ssub.s32 128, 128
      %209 = vsyncadd [#allocation3], %s208
      %s211 = sshll.u32 [#allocation2], 4
      %s212 = int_to_ptr.vmem [resolvable:$true] %s211
      %214 = dma.vmem_to_hbm [thread:$0]  %s212, 128, %s4, [#allocation3]
    $region21: #{tpu_custom_call.1} parent=1 // pred_fallthru
      _
    // Predicated region
    $region22: #{tpu_custom_call.1} parent=1 // pred_check
      _
    $region23: #{tpu_custom_call.1} parent=1 // pred_check_branch
      %216 = sbr.rel (0) target = $region25
    $region24: #{tpu_custom_call.1} parent=1 // pred_region
      %217 = dma.done [#allocation3], 128
    $region25: #{tpu_custom_call.1} parent=1 // pred_fallthru
      _
    %218 = vsyncpa [#allocation3], 1

</llo_original>
